<compile_context>
chip_gen: v7x
topology: tpu7x:2x2x1
jax: 0.10.0
libtpu: 0.0.40
codegen_flags: <defaults>
</compile_context>

<pallas_src>
import functools
import math

import numpy as np
import jax
import jax.numpy as jnp
from jax.experimental import pallas as pl
from jax.experimental.pallas import tpu as pltpu


def _exact_gelu(v):
    # nn.GELU() default is the exact (erf) formulation.
    return 0.5 * v * (1.0 + jax.lax.erf(v * (1.0 / math.sqrt(2.0))))


# --------------------------------------------------------------------------
# Fused SPC kernel: in-kernel BN stats + affine + GELU + shifted "convs"
# (pre-folded into fuse1, one K=4C matmul) + optional full MaxPool2d(3,2,1).
# Single grid step; internal layout (C, H*W) with H*W lane-dense.
# --------------------------------------------------------------------------
def spc_kernel(x_ref, gb_ref, wb_ref, o_ref, *, H, W, step, stride, eps):
    B, C, N = x_ref.shape
    K = 4 * C

    # ---- BatchNorm2d batch statistics (training mode, biased variance).
    xs = [x_ref[b] for b in range(B)]                                   # (C, N) each
    inv_bn = 1.0 / float(B * N)
    mean = sum(x.sum(axis=1, keepdims=True) for x in xs) * inv_bn       # (C, 1)
    var = sum(jnp.sum(jnp.square(x - mean), axis=1, keepdims=True)
              for x in xs) * inv_bn                                     # (C, 1)
    scale = gb_ref[0] * jax.lax.rsqrt(var + eps)                        # (C, 1)
    shift = gb_ref[1] - mean * scale                                    # (C, 1)

    # ---- Packed params: merged branch weights (Co, 4C) + bias column.
    w = wb_ref[:, :K]                                                   # (Co, 4C)
    bias = wb_ref[:, K:]                                                # (Co, 1)

    # ---- One lane iota, broadcast into every shift / pool mask.
    lane = jax.lax.broadcasted_iota(jnp.int32, (1, N), 1)               # (1, N)
    col = lane % W
    sW = step * W
    m_t = lane < N - sW          # y[n + s*W] valid
    m_b = lane >= sW             # y[n - s*W] valid
    m_l = col < W - step         # y[n + s]   valid
    m_r = col >= step            # y[n - s]   valid

    if stride != 1:
        ninf = jnp.float32(-jnp.inf)
        m_pl = col >= 1
        m_pr = col < W - 1
        m_pu = lane >= W
        m_pd = lane < N - W
        # Static 0/1 selection matrix for the stride-2 subsample (MXU is idle).
        Hp, Wp = (H - 1) // 2 + 1, (W - 1) // 2 + 1
        Np = Hp * Wp
        src = jax.lax.broadcasted_iota(jnp.int32, (N, Np), 0)
        dst = jax.lax.broadcasted_iota(jnp.int32, (N, Np), 1)
        sel = ((src // W == 2 * (dst // Wp)) &
               (src % W == 2 * (dst % Wp))).astype(jnp.float32)         # (N, Np)

    # ---- Per-batch body (B tiny and static -> unrolled).
    for b in range(B):
        y = _exact_gelu(xs[b] * scale + shift)                          # BN + GELU, (C, N)

        # Shifted, zero-padded copies via lane rolls (XLU) + broadcast masks.
        # roll(x, s)[n] == x[(n - s) % N]  (np.roll convention).
        y_t = jnp.where(m_t, pltpu.roll(y, N - sW, 1), 0.0)             # y[n + sW]
        y_b = jnp.where(m_b, pltpu.roll(y, sW, 1), 0.0)                 # y[n - sW]
        y_l = jnp.where(m_l, pltpu.roll(y, N - step, 1), 0.0)           # y[n + step]
        y_r = jnp.where(m_r, pltpu.roll(y, step, 1), 0.0)               # y[n - step]

        # Branch convs + fuse1 pre-folded: one K=4C matmul (order t, b, r, l).
        y_cat = jnp.concatenate([y_t, y_b, y_r, y_l], axis=0)           # (4C, N)
        out = jnp.dot(w, y_cat, preferred_element_type=jnp.float32) + bias  # (Co, N)

        if stride != 1:
            # MaxPool2d(3, 2, 1): separable 3x3 max with implicit -inf padding,
            # then stride-2 subsample via the selection matmul.
            left = jnp.where(m_pl, pltpu.roll(out, 1, 1), ninf)         # out[n-1]
            right = jnp.where(m_pr, pltpu.roll(out, N - 1, 1), ninf)    # out[n+1]
            hmax = jnp.maximum(jnp.maximum(left, out), right)
            up = jnp.where(m_pu, pltpu.roll(hmax, W, 1), ninf)          # hmax[n-W]
            down = jnp.where(m_pd, pltpu.roll(hmax, N - W, 1), ninf)    # hmax[n+W]
            out = jnp.maximum(jnp.maximum(up, hmax), down)              # finite (>= out)
            out = jnp.dot(out, sel, preferred_element_type=jnp.float32)  # (Co, Np)

        o_ref[b] = out.astype(o_ref.dtype)


# --------------------------------------------------------------------------
# Wrapper
# --------------------------------------------------------------------------
@functools.partial(jax.jit, static_argnames=("step", "stride"))
def spc_forward(x_nchw, params, *, step, stride):
    B, C, H, W = x_nchw.shape
    N = H * W
    xf = x_nchw.reshape(B, C, N).astype(jnp.float32)        # NCHW -> (B, C, H*W)

    gamma = params["gamma"].reshape(C, 1).astype(jnp.float32)
    beta = params["beta"].reshape(C, 1).astype(jnp.float32)
    gb = jnp.stack([gamma, beta], axis=0)                   # (2, C, 1)

    # Fold the four branch 1x1 convs into fuse1 (exact algebra):
    #   W'_k = (w_k @ w1[k*Cr:(k+1)*Cr]).T,  b' = b1 + sum_k b_k @ w1[k*Cr:(k+1)*Cr]
    # Data-independent; in a real model this would be precomputed once per update.
    Cr = params["wt"].shape[1]
    Co = params["w1"].shape[1]
    hp = jax.lax.Precision.HIGHEST
    w1 = params["w1"].astype(jnp.float32)
    bias = params["b1"].reshape(Co).astype(jnp.float32)
    w_blocks = []
    branches = [(params["wt"], params["bt"]), (params["wb"], params["bb"]),
                (params["wr"], params["br"]), (params["wl"], params["bl"])]
    for k, (wk, bk) in enumerate(branches):
        w1k = w1[k * Cr:(k + 1) * Cr]                                   # (Cr, Co)
        w_blocks.append(jnp.dot(wk.astype(jnp.float32), w1k, precision=hp).T)  # (Co, C)
        bias = bias + jnp.dot(bk.reshape(Cr).astype(jnp.float32), w1k, precision=hp)
    wbias = jnp.concatenate(w_blocks + [bias.reshape(Co, 1)], axis=1)   # (Co, 4C+1)

    if stride != 1:
        Hp, Wp = (H - 1) // 2 + 1, (W - 1) // 2 + 1
    else:
        Hp, Wp = H, W
    Nout = Hp * Wp

    out = pl.pallas_call(
        functools.partial(spc_kernel, H=H, W=W, step=step, stride=stride, eps=1e-5),
        grid=(1,),
        in_specs=[
            pl.BlockSpec((B, C, N), lambda i: (0, 0, 0)),
            pl.BlockSpec((2, C, 1), lambda i: (0, 0, 0)),
            pl.BlockSpec((Co, 4 * C + 1), lambda i: (0, 0)),
        ],
        out_specs=pl.BlockSpec((B, Co, Nout), lambda i: (0, 0, 0)),
        out_shape=jax.ShapeDtypeStruct((B, Co, Nout), jnp.float32),
    )(xf, gb, wbias)

    return out.reshape(B, Co, Hp, Wp)


# --------------------------------------------------------------------------
# Pure-JAX reference (numerical sanity check).
# --------------------------------------------------------------------------
def spc_reference(x_nchw, params, *, step, stride):
    x = jnp.transpose(x_nchw, (0, 2, 3, 1)).astype(jnp.float32)
    mean = jnp.mean(x, axis=(0, 1, 2))
    var = jnp.mean((x - mean) ** 2, axis=(0, 1, 2))
    y = (x - mean) * jax.lax.rsqrt(var + 1e-5) * params["gamma"][0] + params["beta"][0]
    y = _exact_gelu(y)
    B, H, W, C = y.shape
    zr = jnp.zeros((B, step, W, C), y.dtype)
    zc = jnp.zeros((B, H, step, C), y.dtype)
    y_t = jnp.concatenate([y[:, step:], zr], axis=1)
    y_b = jnp.concatenate([zr, y[:, :H - step]], axis=1)
    y_l = jnp.concatenate([y[:, :, step:], zc], axis=2)
    y_r = jnp.concatenate([zc, y[:, :, :W - step]], axis=2)

    def conv(a, w, b):
        return jnp.einsum('bhwc,cd->bhwd', a, w,
                          precision=jax.lax.Precision.HIGHEST) + b[0]

    z = jnp.concatenate([conv(y_t, params["wt"], params["bt"]),
                         conv(y_b, params["wb"], params["bb"]),
                         conv(y_r, params["wr"], params["br"]),
                         conv(y_l, params["wl"], params["bl"])], axis=-1)
    o = jnp.einsum('bhwc,cd->bhwd', z, params["w1"],
                   precision=jax.lax.Precision.HIGHEST) + params["b1"][0]
    if stride != 1:
        o = jax.lax.reduce_window(o, -jnp.inf, jax.lax.max,
                                  (1, 3, 3, 1), (1, 2, 2, 1),
                                  [(0, 0), (1, 1), (1, 1), (0, 0)])
    return jnp.transpose(o, (0, 3, 1, 2))


if __name__ == "__main__":
    # Module config: SPC(channels=8, reduce_rate=2, out_channels=16, step=1)
    B, C, H, W = 2, 8, 16, 16
    reduce_rate, out_channels, step = 2, 16, 1
    Cr = C // reduce_rate

    key = jax.random.PRNGKey(0)
    ks = jax.random.split(key, 14)
    x = jax.random.normal(ks[0], (B, C, H, W), jnp.float32)

    def w_init(k, fan_in, shape):
        return jax.random.normal(k, shape, jnp.float32) / math.sqrt(fan_in)

    params = {
        "gamma": 1.0 + 0.1 * jax.random.normal(ks[1], (1, C), jnp.float32),
        "beta":  0.1 * jax.random.normal(ks[2], (1, C), jnp.float32),
        "wt": w_init(ks[3], C, (C, Cr)),
        "wb": w_init(ks[4], C, (C, Cr)),
        "wr": w_init(ks[5], C, (C, Cr)),
        "wl": w_init(ks[6], C, (C, Cr)),
        "bt": 0.05 * jax.random.normal(ks[7], (1, Cr), jnp.float32),
        "bb": 0.05 * jax.random.normal(ks[8], (1, Cr), jnp.float32),
        "br": 0.05 * jax.random.normal(ks[9], (1, Cr), jnp.float32),
        "bl": 0.05 * jax.random.normal(ks[10], (1, Cr), jnp.float32),
        "w1": w_init(ks[11], 4 * Cr, (4 * Cr, out_channels)),
        "b1": 0.05 * jax.random.normal(ks[12], (1, out_channels), jnp.float32),
    }

    for stride in (1, 2):   # stride=1 skips maxpool; stride=2 exercises it
        out = spc_forward(x, params, step=step, stride=stride)
        out = jax.block_until_ready(out)
        ref = spc_reference(x, params, step=step, stride=stride)
        np.testing.assert_allclose(np.asarray(out), np.asarray(ref),
                                   rtol=1e-3, atol=1e-3)

    print("KERNEL_OK")
</pallas_src>

<mosaic_0001>
module attributes {stable_mosaic.version = 11 : i64} {
  func.func @spc_kernel(%arg0: i32, %arg1: memref<2x8x256xf32, #tpu.memory_space<vmem>>, %arg2: memref<2x8x1xf32, #tpu.memory_space<vmem>>, %arg3: memref<16x33xf32, #tpu.memory_space<vmem>>, %arg4: memref<2x16x256xf32, #tpu.memory_space<vmem>>) attributes {dimension_semantics = [#tpu.dimension_semantics<arbitrary>], iteration_bounds = array<i64: 1>, scalar_prefetch = 0 : i64, scratch_operands = 0 : i64, tpu.core_type = #tpu.core_type<tc>, window_params = [{pipeline_mode = #tpu.pipeline_mode<synchronous>, transform_indices = @transform_0, window_bounds = array<i64: 2, 8, 256>}, {pipeline_mode = #tpu.pipeline_mode<synchronous>, transform_indices = @transform_1, window_bounds = array<i64: 2, 8, 1>}, {pipeline_mode = #tpu.pipeline_mode<synchronous>, transform_indices = @transform_2, window_bounds = array<i64: 16, 33>}, {pipeline_mode = #tpu.pipeline_mode<synchronous>, transform_indices = @transform_3, window_bounds = array<i64: 2, 16, 256>}]} {
    %c0 = arith.constant 0 : index
    %c0_0 = arith.constant 0 : index
    %c0_1 = arith.constant 0 : index
    %0 = vector.load %arg1[%c0, %c0_0, %c0_1] : memref<2x8x256xf32, #tpu.memory_space<vmem>>, vector<1x8x256xf32>
    %1 = vector.shape_cast %0 : vector<1x8x256xf32> to vector<8x256xf32>
    %c1 = arith.constant 1 : index
    %c0_2 = arith.constant 0 : index
    %c0_3 = arith.constant 0 : index
    %2 = vector.load %arg1[%c1, %c0_2, %c0_3] : memref<2x8x256xf32, #tpu.memory_space<vmem>>, vector<1x8x256xf32>
    %3 = vector.shape_cast %2 : vector<1x8x256xf32> to vector<8x256xf32>
    %cst = arith.constant dense<0.000000e+00> : vector<8xf32>
    %4 = vector.multi_reduction <add>, %1, %cst [1] : vector<8x256xf32> to vector<8xf32>
    %5 = vector.shape_cast %4 : vector<8xf32> to vector<8x1xf32>
    %cst_4 = arith.constant 0.000000e+00 : f32
    %6 = vector.broadcast %cst_4 : f32 to vector<8x1xf32>
    %7 = arith.addf %6, %5 : vector<8x1xf32>
    %cst_5 = arith.constant dense<0.000000e+00> : vector<8xf32>
    %8 = vector.multi_reduction <add>, %3, %cst_5 [1] : vector<8x256xf32> to vector<8xf32>
    %9 = vector.shape_cast %8 : vector<8xf32> to vector<8x1xf32>
    %10 = arith.addf %7, %9 : vector<8x1xf32>
    %cst_6 = arith.constant 0.001953125 : f32
    %11 = vector.broadcast %cst_6 : f32 to vector<8x1xf32>
    %12 = arith.mulf %10, %11 : vector<8x1xf32>
    %13 = vector.broadcast %12 : vector<8x1xf32> to vector<8x256xf32>
    %14 = arith.subf %1, %13 : vector<8x256xf32>
    %15 = arith.mulf %14, %14 : vector<8x256xf32>
    %cst_7 = arith.constant dense<0.000000e+00> : vector<8xf32>
    %16 = vector.multi_reduction <add>, %15, %cst_7 [1] : vector<8x256xf32> to vector<8xf32>
    %17 = vector.shape_cast %16 : vector<8xf32> to vector<8x1xf32>
    %cst_8 = arith.constant 0.000000e+00 : f32
    %18 = vector.broadcast %cst_8 : f32 to vector<8x1xf32>
    %19 = arith.addf %18, %17 : vector<8x1xf32>
    %20 = vector.broadcast %12 : vector<8x1xf32> to vector<8x256xf32>
    %21 = arith.subf %3, %20 : vector<8x256xf32>
    %22 = arith.mulf %21, %21 : vector<8x256xf32>
    %cst_9 = arith.constant dense<0.000000e+00> : vector<8xf32>
    %23 = vector.multi_reduction <add>, %22, %cst_9 [1] : vector<8x256xf32> to vector<8xf32>
    %24 = vector.shape_cast %23 : vector<8xf32> to vector<8x1xf32>
    %25 = arith.addf %19, %24 : vector<8x1xf32>
    %cst_10 = arith.constant 0.001953125 : f32
    %26 = vector.broadcast %cst_10 : f32 to vector<8x1xf32>
    %27 = arith.mulf %25, %26 : vector<8x1xf32>
    %c0_11 = arith.constant 0 : index
    %c0_12 = arith.constant 0 : index
    %c0_13 = arith.constant 0 : index
    %28 = vector.load %arg2[%c0_11, %c0_12, %c0_13] : memref<2x8x1xf32, #tpu.memory_space<vmem>>, vector<1x8x1xf32>
    %29 = vector.shape_cast %28 : vector<1x8x1xf32> to vector<8x1xf32>
    %cst_14 = arith.constant 9.99999974E-6 : f32
    %30 = vector.broadcast %cst_14 : f32 to vector<8x1xf32>
    %31 = arith.addf %27, %30 : vector<8x1xf32>
    %32 = math.rsqrt %31 : vector<8x1xf32>
    %33 = arith.mulf %29, %32 : vector<8x1xf32>
    %c1_15 = arith.constant 1 : index
    %c0_16 = arith.constant 0 : index
    %c0_17 = arith.constant 0 : index
    %34 = vector.load %arg2[%c1_15, %c0_16, %c0_17] : memref<2x8x1xf32, #tpu.memory_space<vmem>>, vector<1x8x1xf32>
    %35 = vector.shape_cast %34 : vector<1x8x1xf32> to vector<8x1xf32>
    %36 = arith.mulf %12, %33 : vector<8x1xf32>
    %37 = arith.subf %35, %36 : vector<8x1xf32>
    %c0_18 = arith.constant 0 : index
    %c0_19 = arith.constant 0 : index
    %38 = vector.load %arg3[%c0_18, %c0_19] : memref<16x33xf32, #tpu.memory_space<vmem>>, vector<16x32xf32>
    %c0_20 = arith.constant 0 : index
    %c32 = arith.constant 32 : index
    %39 = vector.load %arg3[%c0_20, %c32] : memref<16x33xf32, #tpu.memory_space<vmem>>, vector<16x1xf32>
    %40 = tpu.iota {dimensions = array<i32: 1>} : vector<1x256xi32>
    %c16_i32 = arith.constant 16 : i32
    %c0_i32 = arith.constant 0 : i32
    %41 = arith.cmpi eq, %c16_i32, %c0_i32 : i32
    %c1_i32 = arith.constant 1 : i32
    %42 = arith.select %41, %c1_i32, %c16_i32 : i32
    %43 = vector.broadcast %42 : i32 to vector<1x256xi32>
    %44 = arith.remsi %40, %43 : vector<1x256xi32>
    %c0_i32_21 = arith.constant 0 : i32
    %45 = vector.broadcast %c0_i32_21 : i32 to vector<1x256xi32>
    %46 = arith.cmpi ne, %44, %45 : vector<1x256xi32>
    %c0_i32_22 = arith.constant 0 : i32
    %47 = vector.broadcast %c0_i32_22 : i32 to vector<1x256xi32>
    %48 = arith.cmpi slt, %44, %47 : vector<1x256xi32>
    %c0_i32_23 = arith.constant 0 : i32
    %49 = arith.cmpi slt, %42, %c0_i32_23 : i32
    %50 = vector.broadcast %49 : i1 to vector<1x256xi1>
    %51 = vector.broadcast %50 : vector<1x256xi1> to vector<1x256xi1>
    %52 = arith.xori %48, %51 : vector<1x256xi1>
    %53 = arith.andi %52, %46 : vector<1x256xi1>
    %54 = vector.broadcast %42 : i32 to vector<1x256xi32>
    %55 = arith.addi %44, %54 : vector<1x256xi32>
    %56 = arith.select %53, %55, %44 : vector<1x256xi1>, vector<1x256xi32>
    %c240_i32 = arith.constant 240 : i32
    %57 = vector.broadcast %c240_i32 : i32 to vector<1x256xi32>
    %58 = arith.cmpi slt, %40, %57 : vector<1x256xi32>
    %c16_i32_24 = arith.constant 16 : i32
    %59 = vector.broadcast %c16_i32_24 : i32 to vector<1x256xi32>
    %60 = arith.cmpi sge, %40, %59 : vector<1x256xi32>
    %c15_i32 = arith.constant 15 : i32
    %61 = vector.broadcast %c15_i32 : i32 to vector<1x256xi32>
    %62 = arith.cmpi slt, %56, %61 : vector<1x256xi32>
    %c1_i32_25 = arith.constant 1 : i32
    %63 = vector.broadcast %c1_i32_25 : i32 to vector<1x256xi32>
    %64 = arith.cmpi sge, %56, %63 : vector<1x256xi32>
    %65 = vector.broadcast %33 : vector<8x1xf32> to vector<8x256xf32>
    %66 = arith.mulf %1, %65 : vector<8x256xf32>
    %67 = vector.broadcast %37 : vector<8x1xf32> to vector<8x256xf32>
    %68 = arith.addf %66, %67 : vector<8x256xf32>
    %cst_26 = arith.constant 5.000000e-01 : f32
    %69 = vector.broadcast %cst_26 : f32 to vector<8x256xf32>
    %70 = arith.mulf %69, %68 : vector<8x256xf32>
    %cst_27 = arith.constant 0.707106769 : f32
    %71 = vector.broadcast %cst_27 : f32 to vector<8x256xf32>
    %72 = arith.mulf %68, %71 : vector<8x256xf32>
    %73 = math.erf %72 : vector<8x256xf32>
    %cst_28 = arith.constant 1.000000e+00 : f32
    %74 = vector.broadcast %cst_28 : f32 to vector<8x256xf32>
    %75 = arith.addf %74, %73 : vector<8x256xf32>
    %76 = arith.mulf %70, %75 : vector<8x256xf32>
    %c240_i32_29 = arith.constant 240 : i32
    %77 = tpu.dynamic_rotate %76 by %c240_i32_29 dim 1 : vector<8x256xf32>, i32 -> vector<8x256xf32>
    %cst_30 = arith.constant 0.000000e+00 : f32
    %78 = vector.shape_cast %58 : vector<1x256xi1> to vector<1x256xi1>
    %79 = vector.broadcast %78 : vector<1x256xi1> to vector<8x256xi1>
    %80 = vector.broadcast %cst_30 : f32 to vector<8x256xf32>
    %81 = arith.select %79, %77, %80 : vector<8x256xi1>, vector<8x256xf32>
    %c16_i32_31 = arith.constant 16 : i32
    %82 = tpu.dynamic_rotate %76 by %c16_i32_31 dim 1 : vector<8x256xf32>, i32 -> vector<8x256xf32>
    %cst_32 = arith.constant 0.000000e+00 : f32
    %83 = vector.shape_cast %60 : vector<1x256xi1> to vector<1x256xi1>
    %84 = vector.broadcast %83 : vector<1x256xi1> to vector<8x256xi1>
    %85 = vector.broadcast %cst_32 : f32 to vector<8x256xf32>
    %86 = arith.select %84, %82, %85 : vector<8x256xi1>, vector<8x256xf32>
    %c255_i32 = arith.constant 255 : i32
    %87 = tpu.dynamic_rotate %76 by %c255_i32 dim 1 : vector<8x256xf32>, i32 -> vector<8x256xf32>
    %cst_33 = arith.constant 0.000000e+00 : f32
    %88 = vector.shape_cast %62 : vector<1x256xi1> to vector<1x256xi1>
    %89 = vector.broadcast %88 : vector<1x256xi1> to vector<8x256xi1>
    %90 = vector.broadcast %cst_33 : f32 to vector<8x256xf32>
    %91 = arith.select %89, %87, %90 : vector<8x256xi1>, vector<8x256xf32>
    %c1_i32_34 = arith.constant 1 : i32
    %92 = tpu.dynamic_rotate %76 by %c1_i32_34 dim 1 : vector<8x256xf32>, i32 -> vector<8x256xf32>
    %cst_35 = arith.constant 0.000000e+00 : f32
    %93 = vector.shape_cast %64 : vector<1x256xi1> to vector<1x256xi1>
    %94 = vector.broadcast %93 : vector<1x256xi1> to vector<8x256xi1>
    %95 = vector.broadcast %cst_35 : f32 to vector<8x256xf32>
    %96 = arith.select %94, %92, %95 : vector<8x256xi1>, vector<8x256xf32>
    %97 = tpu.concatenate %81, %86, %96, %91 in 0 : vector<8x256xf32>, vector<8x256xf32>, vector<8x256xf32>, vector<8x256xf32> -> vector<32x256xf32>
    %cst_36 = arith.constant dense<0.000000e+00> : vector<16x256xf32>
    %98 = tpu.matmul %38, %97, %cst_36 {dimension_numbers = #tpu.dot_dimension_numbers<[1], [0], [0], [1], [0, 0, 1, 1], [], []>} : vector<16x32xf32>, vector<32x256xf32>, vector<16x256xf32> -> vector<16x256xf32>
    %99 = vector.broadcast %39 : vector<16x1xf32> to vector<16x256xf32>
    %100 = arith.addf %98, %99 : vector<16x256xf32>
    %c0_37 = arith.constant 0 : index
    %c0_38 = arith.constant 0 : index
    %c0_39 = arith.constant 0 : index
    %101 = vector.load %arg4[%c0_37, %c0_38, %c0_39] : memref<2x16x256xf32, #tpu.memory_space<vmem>>, vector<1x16x256xf32>
    %102 = vector.shape_cast %101 : vector<1x16x256xf32> to vector<16x256xf32>
    %103 = vector.shape_cast %100 : vector<16x256xf32> to vector<1x16x256xf32>
    tpu.vector_store %arg4[%c0_37, %c0_38, %c0_39], %103 {strides = array<i32>} : memref<2x16x256xf32, #tpu.memory_space<vmem>>, vector<1x16x256xf32>,
    %104 = vector.broadcast %33 : vector<8x1xf32> to vector<8x256xf32>
    %105 = arith.mulf %3, %104 : vector<8x256xf32>
    %106 = vector.broadcast %37 : vector<8x1xf32> to vector<8x256xf32>
    %107 = arith.addf %105, %106 : vector<8x256xf32>
    %cst_40 = arith.constant 5.000000e-01 : f32
    %108 = vector.broadcast %cst_40 : f32 to vector<8x256xf32>
    %109 = arith.mulf %108, %107 : vector<8x256xf32>
    %cst_41 = arith.constant 0.707106769 : f32
    %110 = vector.broadcast %cst_41 : f32 to vector<8x256xf32>
    %111 = arith.mulf %107, %110 : vector<8x256xf32>
    %112 = math.erf %111 : vector<8x256xf32>
    %cst_42 = arith.constant 1.000000e+00 : f32
    %113 = vector.broadcast %cst_42 : f32 to vector<8x256xf32>
    %114 = arith.addf %113, %112 : vector<8x256xf32>
    %115 = arith.mulf %109, %114 : vector<8x256xf32>
    %c240_i32_43 = arith.constant 240 : i32
    %116 = tpu.dynamic_rotate %115 by %c240_i32_43 dim 1 : vector<8x256xf32>, i32 -> vector<8x256xf32>
    %cst_44 = arith.constant 0.000000e+00 : f32
    %117 = vector.shape_cast %58 : vector<1x256xi1> to vector<1x256xi1>
    %118 = vector.broadcast %117 : vector<1x256xi1> to vector<8x256xi1>
    %119 = vector.broadcast %cst_44 : f32 to vector<8x256xf32>
    %120 = arith.select %118, %116, %119 : vector<8x256xi1>, vector<8x256xf32>
    %c16_i32_45 = arith.constant 16 : i32
    %121 = tpu.dynamic_rotate %115 by %c16_i32_45 dim 1 : vector<8x256xf32>, i32 -> vector<8x256xf32>
    %cst_46 = arith.constant 0.000000e+00 : f32
    %122 = vector.shape_cast %60 : vector<1x256xi1> to vector<1x256xi1>
    %123 = vector.broadcast %122 : vector<1x256xi1> to vector<8x256xi1>
    %124 = vector.broadcast %cst_46 : f32 to vector<8x256xf32>
    %125 = arith.select %123, %121, %124 : vector<8x256xi1>, vector<8x256xf32>
    %c255_i32_47 = arith.constant 255 : i32
    %126 = tpu.dynamic_rotate %115 by %c255_i32_47 dim 1 : vector<8x256xf32>, i32 -> vector<8x256xf32>
    %cst_48 = arith.constant 0.000000e+00 : f32
    %127 = vector.shape_cast %62 : vector<1x256xi1> to vector<1x256xi1>
    %128 = vector.broadcast %127 : vector<1x256xi1> to vector<8x256xi1>
    %129 = vector.broadcast %cst_48 : f32 to vector<8x256xf32>
    %130 = arith.select %128, %126, %129 : vector<8x256xi1>, vector<8x256xf32>
    %c1_i32_49 = arith.constant 1 : i32
    %131 = tpu.dynamic_rotate %115 by %c1_i32_49 dim 1 : vector<8x256xf32>, i32 -> vector<8x256xf32>
    %cst_50 = arith.constant 0.000000e+00 : f32
    %132 = vector.shape_cast %64 : vector<1x256xi1> to vector<1x256xi1>
    %133 = vector.broadcast %132 : vector<1x256xi1> to vector<8x256xi1>
    %134 = vector.broadcast %cst_50 : f32 to vector<8x256xf32>
    %135 = arith.select %133, %131, %134 : vector<8x256xi1>, vector<8x256xf32>
    %136 = tpu.concatenate %120, %125, %135, %130 in 0 : vector<8x256xf32>, vector<8x256xf32>, vector<8x256xf32>, vector<8x256xf32> -> vector<32x256xf32>
    %cst_51 = arith.constant dense<0.000000e+00> : vector<16x256xf32>
    %137 = tpu.matmul %38, %136, %cst_51 {dimension_numbers = #tpu.dot_dimension_numbers<[1], [0], [0], [1], [0, 0, 1, 1], [], []>} : vector<16x32xf32>, vector<32x256xf32>, vector<16x256xf32> -> vector<16x256xf32>
    %138 = vector.broadcast %39 : vector<16x1xf32> to vector<16x256xf32>
    %139 = arith.addf %137, %138 : vector<16x256xf32>
    %c1_52 = arith.constant 1 : index
    %c0_53 = arith.constant 0 : index
    %c0_54 = arith.constant 0 : index
    %140 = vector.load %arg4[%c1_52, %c0_53, %c0_54] : memref<2x16x256xf32, #tpu.memory_space<vmem>>, vector<1x16x256xf32>
    %141 = vector.shape_cast %140 : vector<1x16x256xf32> to vector<16x256xf32>
    %142 = vector.shape_cast %139 : vector<16x256xf32> to vector<1x16x256xf32>
    tpu.vector_store %arg4[%c1_52, %c0_53, %c0_54], %142 {strides = array<i32>} : memref<2x16x256xf32, #tpu.memory_space<vmem>>, vector<1x16x256xf32>,
    return
  }
  func.func @transform_0(%arg0: i32) -> (i32, i32, i32) {
    %c0_i32 = arith.constant 0 : i32
    %c0_i32_0 = arith.constant 0 : i32
    %c0_i32_1 = arith.constant 0 : i32
    %c0_i32_2 = arith.constant 0 : i32
    return %c0_i32, %c0_i32_0, %c0_i32_1 : i32, i32, i32
  }
  func.func @transform_1(%arg0: i32) -> (i32, i32, i32) {
    %c0_i32 = arith.constant 0 : i32
    %c0_i32_0 = arith.constant 0 : i32
    %c0_i32_1 = arith.constant 0 : i32
    %c0_i32_2 = arith.constant 0 : i32
    return %c0_i32, %c0_i32_0, %c0_i32_1 : i32, i32, i32
  }
  func.func @transform_2(%arg0: i32) -> (i32, i32) {
    %c0_i32 = arith.constant 0 : i32
    %c0_i32_0 = arith.constant 0 : i32
    %c0_i32_1 = arith.constant 0 : i32
    return %c0_i32, %c0_i32_0 : i32, i32
  }
  func.func @transform_3(%arg0: i32) -> (i32, i32, i32) {
    %c0_i32 = arith.constant 0 : i32
    %c0_i32_0 = arith.constant 0 : i32
    %c0_i32_1 = arith.constant 0 : i32
    %c0_i32_2 = arith.constant 0 : i32
    return %c0_i32, %c0_i32_0, %c0_i32_1 : i32, i32, i32
  }
}

</mosaic_0001>

<llo_original>
// kernel: spc_forward.1
$region0: #{spc_forward.1}
  #allocation0 [shape = 'u32[]', space=smem, size = 0x4, offset = 0x4, fixed_abs, tag = 'smem constant byte address 0x4 - core index']
  #allocation1 [shape = 'u32[144,128]{1,0:T(1,128)}', space=vmem, size = 0x12000, scoped, tag = 'internal scratch']
  %s0 = inlined_call_operand.vmem [shape: f32[2,8,256], index: 0, kind: input, shape index: {}]
  %s1 = inlined_call_operand.vmem [shape: f32[2,8,1], index: 1, kind: input, shape index: {}]
  %s2 = inlined_call_operand.vmem [shape: f32[16,33], index: 2, kind: input, shape index: {}]
  %s3 = inlined_call_operand.vmem [shape: f32[2,16,256], index: 3, kind: output, shape index: {}]
  %s4 = sld [smem:[#allocation0]]
  $region22: #{spc_forward.1} parent=0
    _
  %s6 = ssub.s32 1, %s4
  %s7 = scalar_select 0, %s6, %s4
  // Predicated region
  $region2: #{spc_forward.1} parent=0 // pred_check
    _
  $region3: #{spc_forward.1} parent=0 // pred_check_branch
    %9 = sbr.rel (0) target = $region5
  $region4: #{spc_forward.1} parent=0 // pred_region
    _
  $region5: #{spc_forward.1} parent=0 // pred_fallthru
    _
  // Predicated region
  $region6: #{spc_forward.1} parent=0 // pred_check
    _
  $region7: #{spc_forward.1} parent=0 // pred_check_branch
    %11 = sbr.rel (0) target = $region9
  $region8: #{spc_forward.1} parent=0 // pred_region
    _
  $region9: #{spc_forward.1} parent=0 // pred_fallthru
    _
  // Predicated region
  $region10: #{spc_forward.1} parent=0 // pred_check
    _
  $region11: #{spc_forward.1} parent=0 // pred_check_branch
    %13 = sbr.rel (0) target = $region13
  $region12: #{spc_forward.1} parent=0 // pred_region
    _
  $region13: #{spc_forward.1} parent=0 // pred_fallthru
    _
  %v14 = vld [vmem:[%s0] sm:$0xff]
  %v15 = vld [vmem:[%s0 + $0x8] sm:$0xff]
  %s16 = scalar_lea.vmem %s0, 16
  %v17 = vld [vmem:[%s16] sm:$0xff]
  %v18 = vld [vmem:[%s16 + $0x8] sm:$0xff]
  %v19 = vadd.f32 %v14, %v15
  %20 = vadd.xlane.f32.xlu0 %v19
  %v21 = vpop.xlane.xlu0 %20
  %v22 = vadd.f32 %v21, 0.0
  %v23 = vadd.f32 %v17, %v18
  %24 = vadd.xlane.f32.xlu0 %v23
  %v25 = vpop.xlane.xlu0 %24
  %v26 = vadd.f32 %v22, %v25
  %v27 = vmul.f32 %v26, 0.001953125
  %v28 = vsub.f32 %v14, %v27
  %v29 = vsub.f32 %v15, %v27
  %v30 = vmul.f32 %v28, %v28
  %v31 = vmul.f32 %v29, %v29
  %v32 = vadd.f32 %v30, %v31
  %33 = vadd.xlane.f32.xlu0 %v32
  %v34 = vpop.xlane.xlu0 %33
  %v35 = vadd.f32 %v34, 0.0
  %v36 = vsub.f32 %v17, %v27
  %v37 = vsub.f32 %v18, %v27
  %v38 = vmul.f32 %v36, %v36
  %v39 = vmul.f32 %v37, %v37
  %v40 = vadd.f32 %v38, %v39
  %41 = vadd.xlane.f32.xlu0 %v40
  %v42 = vpop.xlane.xlu0 %41
  %v43 = vadd.f32 %v35, %v42
  %v44 = vmul.f32 %v43, 0.001953125
  %v45 = vld [vmem:[%s1] sm:$0xff]
  %v46 = vadd.f32 %v44, 1e-05
  %v47 = vrsqrt.pop %v46
  %v48 = vmul.f32 %v45, %v47
  %s49 = scalar_lea.vmem %s1, 8
  %v50 = vld [vmem:[%s49] sm:$0xff]
  %v51 = vmul.f32 %v27, %v48
  %v52 = vsub.f32 %v50, %v51
  %v53 = vld [vmem:[%s2] sm:$0xff]
  %v54 = vld [vmem:[%s2 + $0x8] sm:$0xff]
  %v55 = vlaneseq
  %v56 = vand.u32 %v55, 127
  %v57 = vadd.s32 %v56, 128
  %vm58 = vcmp.lt.s32.totalorder %v56, 0
  %v59 = vsub.s32 0, %v56
  %v60 = vsel %vm58, %v59, %v56
  %v61 = vshrl.u32 %v60, 4
  %v62 = vand.u32 %v60, 15
  %v63 = vsub.s32 0, %v62
  %v64 = vsel %vm58, %v63, %v62
  %vm65 = vcmp.lt.s32.totalorder %v57, 0
  %v66 = vsub.s32 0, %v57
  %v67 = vsel %vm65, %v66, %v57
  %v68 = vshrl.u32 %v67, 4
  %v69 = vand.u32 %v67, 15
  %v70 = vsub.s32 0, %v69
  %v71 = vsel %vm65, %v70, %v69
  %vm72 = vcmp.ne.s32.totalorder %v64, 0
  %vm73 = vcmp.ne.s32.totalorder %v71, 0
  %vm74 = vcmp.lt.s32.totalorder %v64, 0
  %vm75 = vcmp.lt.s32.totalorder %v71, 0
  %vm76 = vmand %vm74, %vm72
  %vm77 = vmand %vm75, %vm73
  %v78 = vadd.s32 %v64, 16
  %v79 = vadd.s32 %v71, 16
  %v80 = vsel %vm76, %v78, %v64
  %v81 = vsel %vm77, %v79, %v71
  %vm82 = vcmp.lt.s32.totalorder %v56, 240
  %vm83 = vcmp.lt.s32.totalorder %v57, 240
  %vm84 = vcmp.ge.s32.totalorder %v56, 16
  %vm85 = vcmp.ge.s32.totalorder %v57, 16
  %vm86 = vcmp.lt.s32.totalorder %v80, 15
  %vm87 = vcmp.lt.s32.totalorder %v81, 15
  %vm88 = vcmp.ge.s32.totalorder %v80, 1
  %vm89 = vcmp.ge.s32.totalorder %v81, 1
  %91 = vset.pattern.permute.xlu0 0
  %92 = vperm.xlu0 %91, %v48
  %v93 = vpop.permute.xlu0 %92
  %v95 = vmul.f32 %v14, %v93
  %v96 = vmul.f32 %v15, %v93
  %98 = vset.pattern.permute.xlu0 0
  %99 = vperm.xlu0 %98, %v52
  %v100 = vpop.permute.xlu0 %99
  %v102 = vadd.f32 %v95, %v100
  %v103 = vadd.f32 %v96, %v100
  %v104 = vmul.f32 %v102, 0.5
  %v105 = vmul.f32 %v103, 0.5
  %v106 = vmul.f32 %v102, 0.70710677
  %v107 = vmul.f32 %v103, 0.70710677
  %v108 = verf.f32.pop %v106
  %v109 = verf.f32.pop %v107
  %v110 = vadd.f32 %v108, 1.0
  %v111 = vadd.f32 %v109, 1.0
  %v112 = vmul.f32 %v104, %v110
  %v113 = vmul.f32 %v105, %v111
  %114 = vrot.lane.b32.xlu0 %v112, 112
  %v115 = vpop.permute.xlu0 %114
  %116 = vrot.lane.b32.xlu0 %v113, 112
  %v117 = vpop.permute.xlu0 %116
  %vm118 = vcmp.lt.s32.totalorder %v56, 112
  %v119 = vsel %vm118, %v115, %v117
  %v120 = vsel %vm118, %v117, %v115
  %v121 = vsel %vm82, 1, 0
  %v122 = vsel %vm83, 1, 0
  %vm123 = vcmp.eq.s32.totalorder %v121, 1
  %vm124 = vcmp.eq.s32.totalorder %v122, 1
  %v125 = vsel %vm123, %v119, 0.0
  %v126 = vsel %vm124, %v120, 0.0
  %127 = vrot.lane.b32.xlu0 %v112, 16
  %v128 = vpop.permute.xlu0 %127
  %129 = vrot.lane.b32.xlu0 %v113, 16
  %v130 = vpop.permute.xlu0 %129
  %vm131 = vcmp.lt.s32.totalorder %v56, 16
  %v132 = vsel %vm131, %v128, %v130
  %v133 = vsel %vm131, %v130, %v128
  %v134 = vsel %vm84, 1, 0
  %v135 = vsel %vm85, 1, 0
  %vm136 = vcmp.eq.s32.totalorder %v134, 1
  %vm137 = vcmp.eq.s32.totalorder %v135, 1
  %v138 = vsel %vm136, %v133, 0.0
  %v139 = vsel %vm137, %v132, 0.0
  %140 = vrot.lane.b32.xlu0 %v112, 127
  %v141 = vpop.permute.xlu0 %140
  %142 = vrot.lane.b32.xlu0 %v113, 127
  %v143 = vpop.permute.xlu0 %142
  %vm144 = vcmp.lt.s32.totalorder %v56, 127
  %v145 = vsel %vm144, %v141, %v143
  %v146 = vsel %vm144, %v143, %v141
  %v147 = vsel %vm86, 1, 0
  %v148 = vsel %vm87, 1, 0
  %vm149 = vcmp.eq.s32.totalorder %v147, 1
  %vm150 = vcmp.eq.s32.totalorder %v148, 1
  %v151 = vsel %vm149, %v145, 0.0
  %v152 = vsel %vm150, %v146, 0.0
  %153 = vrot.lane.b32.xlu0 %v112, 1
  %v154 = vpop.permute.xlu0 %153
  %155 = vrot.lane.b32.xlu0 %v113, 1
  %v156 = vpop.permute.xlu0 %155
  %vm157 = vcmp.lt.s32.totalorder %v56, 1
  %v158 = vsel %vm157, %v154, %v156
  %v159 = vsel %vm157, %v156, %v154
  %v160 = vsel %vm88, 1, 0
  %v161 = vsel %vm89, 1, 0
  %vm162 = vcmp.eq.s32.totalorder %v160, 1
  %vm163 = vcmp.eq.s32.totalorder %v161, 1
  %v164 = vsel %vm162, %v159, 0.0
  %v165 = vsel %vm163, %v158, 0.0
  %167 = vset.pattern.permute.xlu0 32
  %168 = vperm.xlu0 %167, %v53
  %v169 = vpop.permute.xlu0 %168
  %172 = vset.pattern.permute.xlu0 32
  %173 = vperm.xlu0 %172, %v54
  %v174 = vpop.permute.xlu0 %173
  %vm176 = vcmask 261120
  %v177 = vsel %vm176, %v53, 0
  %v179 = vsel %vm176, %v54, 0
  %181 = vmatprep.subr.mxu0 %v126
  %182 = vmatpush1.msra.mxu0 %v125
  %183 = vmatprep.subr.mxu0 %v139
  %184 = vmatpush1.msra.mxu0 %v138
  %185 = vmatprep.subr.mxu0 %v165
  %186 = vmatpush1.msra.mxu0 %v164
  %187 = vmatprep.subr.mxu0 %v152
  %188 = vmatpush1.msra.mxu0 %v151
  %189 = vmatprep.subr.mxu0 0.0
  %190 = vmatpush1.msra.mxu0 0.0
  %191 = vmatprep.subr.mxu0 0.0
  %192 = vmatpush1.msra.mxu0 0.0
  %193 = vmatprep.subr.mxu0 0.0
  %194 = vmatpush1.msra.mxu0 0.0
  %195 = vmatprep.subr.mxu0 0.0
  %196 = vmatpush1.msra.mxu0 0.0
  %197 = vmatprep.subr.mxu0 0.0
  %198 = vmatpush1.msra.mxu0 0.0
  %199 = vmatprep.subr.mxu0 0.0
  %200 = vmatpush1.msra.mxu0 0.0
  %201 = vmatprep.subr.mxu0 0.0
  %202 = vmatpush1.msra.mxu0 0.0
  %203 = vmatprep.subr.mxu0 0.0
  %204 = vmatpush1.msra.mxu0 0.0
  %205 = vmatprep.subr.mxu0 0.0
  %206 = vmatpush1.msra.mxu0 0.0
  %207 = vmatprep.subr.mxu0 0.0
  %208 = vmatpush1.msra.mxu0 0.0
  %209 = vmatprep.subr.mxu0 0.0
  %210 = vmatpush1.msra.mxu0 0.0
  %211 = vmatprep.subr.mxu0 0.0
  %212 = vmatpush1.msra.mxu0 0.0
  %213 = vmatprep.subr.mxu0 0.0
  %214 = vmatpush1.msra.mxu0 0.0
  %215 = vmatprep.subr.mxu0 0.0
  %216 = vmatpush1.msra.mxu0 0.0
  %217 = vmatprep.subr.mxu0 0.0
  %218 = vmatpush1.msra.mxu0 0.0
  %219 = vmatprep.subr.mxu0 0.0
  %220 = vmatpush1.msra.mxu0 0.0
  %221 = vmatprep.subr.mxu0 0.0
  %222 = vmatpush1.msra.mxu0 0.0
  %223 = vmatprep.subr.mxu0 0.0
  %224 = vmatpush1.msra.mxu0 0.0
  %225 = vmatprep.subr.mxu0 0.0
  %226 = vmatpush1.msra.mxu0 0.0
  %227 = vmatprep.subr.mxu0 0.0
  %228 = vmatpush1.msra.mxu0 0.0
  %229 = vmatprep.subr.mxu0 0.0
  %230 = vmatpush1.msra.mxu0 0.0
  %231 = vmatprep.subr.mxu0 0.0
  %232 = vmatpush1.msra.mxu0 0.0
  %233 = vmatprep.subr.mxu0 0.0
  %234 = vmatpush1.msra.mxu0 0.0
  %235 = vmatprep.subr.mxu0 0.0
  %236 = vmatpush1.msra.mxu0 0.0
  %237 = vmatprep.subr.mxu0 0.0
  %238 = vmatpush1.msra.mxu0 0.0
  %239 = vmatprep.subr.mxu0 0.0
  %240 = vmatpush1.msra.mxu0 0.0
  %241 = vmatprep.subr.mxu0 0.0
  %242 = vmatpush1.msra.mxu0 0.0
  %243 = vmatprep.subr.mxu0 0.0
  %244 = vmatpush1.msra.mxu0 0.0
  %245 = vmatprep.mubr.f32.mxu0 0.0
  %246 = vmatmul.mubr.f32.gmra.mrb[0].mxu0 %v177
  %v247 = vpop.f32.mrb[0].mxu0
  %v248 = vadd.f32 %v169, %v247
  %v249 = vpop.f32.mrb[0].mxu0
  %v250 = vadd.f32 %v169, %v249
  %251 = vmatprep.mubr.f32.mxu0 0.0
  %252 = vmatmul.mubr.f32.gmra.mrb[0].mxu0 %v179
  %v253 = vpop.f32.mrb[0].mxu0
  %v254 = vadd.f32 %v174, %v253
  %v255 = vpop.f32.mrb[0].mxu0
  %v256 = vadd.f32 %v174, %v255
  %257 = vdwg.mxu0
  %258 = vst [vmem:[%s3] sm:$0xff] %v248
  %259 = vst [vmem:[%s3 + $0x8] sm:$0xff] %v250
  %260 = vst [vmem:[%s3 + $0x10] sm:$0xff] %v254
  %261 = vst [vmem:[%s3 + $0x18] sm:$0xff] %v256
  %v262 = vmul.f32 %v17, %v93
  %v263 = vmul.f32 %v18, %v93
  %v264 = vadd.f32 %v262, %v100
  %v265 = vadd.f32 %v263, %v100
  %v266 = vmul.f32 %v264, 0.5
  %v267 = vmul.f32 %v265, 0.5
  %v268 = vmul.f32 %v264, 0.70710677
  %v269 = vmul.f32 %v265, 0.70710677
  %v270 = verf.f32.pop %v268
  %v271 = verf.f32.pop %v269
  %v272 = vadd.f32 %v270, 1.0
  %v273 = vadd.f32 %v271, 1.0
  %v274 = vmul.f32 %v266, %v272
  %v275 = vmul.f32 %v267, %v273
  %276 = vrot.lane.b32.xlu0 %v274, 112
  %v277 = vpop.permute.xlu0 %276
  %278 = vrot.lane.b32.xlu0 %v275, 112
  %v279 = vpop.permute.xlu0 %278
  %v280 = vsel %vm118, %v277, %v279
  %v281 = vsel %vm118, %v279, %v277
  %v282 = vsel %vm123, %v280, 0.0
  %v283 = vsel %vm124, %v281, 0.0
  %284 = vrot.lane.b32.xlu0 %v274, 16
  %v285 = vpop.permute.xlu0 %284
  %286 = vrot.lane.b32.xlu0 %v275, 16
  %v287 = vpop.permute.xlu0 %286
  %v288 = vsel %vm131, %v285, %v287
  %v289 = vsel %vm131, %v287, %v285
  %v290 = vsel %vm136, %v289, 0.0
  %v291 = vsel %vm137, %v288, 0.0
  %292 = vrot.lane.b32.xlu0 %v274, 127
  %v293 = vpop.permute.xlu0 %292
  %294 = vrot.lane.b32.xlu0 %v275, 127
  %v295 = vpop.permute.xlu0 %294
  %v296 = vsel %vm144, %v293, %v295
  %v297 = vsel %vm144, %v295, %v293
  %v298 = vsel %vm149, %v296, 0.0
  %v299 = vsel %vm150, %v297, 0.0
  %300 = vrot.lane.b32.xlu0 %v274, 1
  %v301 = vpop.permute.xlu0 %300
  %302 = vrot.lane.b32.xlu0 %v275, 1
  %v303 = vpop.permute.xlu0 %302
  %v304 = vsel %vm157, %v301, %v303
  %v305 = vsel %vm157, %v303, %v301
  %v306 = vsel %vm162, %v305, 0.0
  %v307 = vsel %vm163, %v304, 0.0
  %308 = vmatprep.subr.mxu0 %v283
  %309 = vmatpush1.msra.mxu0 %v282
  %310 = vmatprep.subr.mxu0 %v291
  %311 = vmatpush1.msra.mxu0 %v290
  %312 = vmatprep.subr.mxu0 %v307
  %313 = vmatpush1.msra.mxu0 %v306
  %314 = vmatprep.subr.mxu0 %v299
  %315 = vmatpush1.msra.mxu0 %v298
  %316 = vmatprep.subr.mxu0 0.0
  %317 = vmatpush1.msra.mxu0 0.0
  %318 = vmatprep.subr.mxu0 0.0
  %319 = vmatpush1.msra.mxu0 0.0
  %320 = vmatprep.subr.mxu0 0.0
  %321 = vmatpush1.msra.mxu0 0.0
  %322 = vmatprep.subr.mxu0 0.0
  %323 = vmatpush1.msra.mxu0 0.0
  %324 = vmatprep.subr.mxu0 0.0
  %325 = vmatpush1.msra.mxu0 0.0
  %326 = vmatprep.subr.mxu0 0.0
  %327 = vmatpush1.msra.mxu0 0.0
  %328 = vmatprep.subr.mxu0 0.0
  %329 = vmatpush1.msra.mxu0 0.0
  %330 = vmatprep.subr.mxu0 0.0
  %331 = vmatpush1.msra.mxu0 0.0
  %332 = vmatprep.subr.mxu0 0.0
  %333 = vmatpush1.msra.mxu0 0.0
  %334 = vmatprep.subr.mxu0 0.0
  %335 = vmatpush1.msra.mxu0 0.0
  %336 = vmatprep.subr.mxu0 0.0
  %337 = vmatpush1.msra.mxu0 0.0
  %338 = vmatprep.subr.mxu0 0.0
  %339 = vmatpush1.msra.mxu0 0.0
  %340 = vmatprep.subr.mxu0 0.0
  %341 = vmatpush1.msra.mxu0 0.0
  %342 = vmatprep.subr.mxu0 0.0
  %343 = vmatpush1.msra.mxu0 0.0
  %344 = vmatprep.subr.mxu0 0.0
  %345 = vmatpush1.msra.mxu0 0.0
  %346 = vmatprep.subr.mxu0 0.0
  %347 = vmatpush1.msra.mxu0 0.0
  %348 = vmatprep.subr.mxu0 0.0
  %349 = vmatpush1.msra.mxu0 0.0
  %350 = vmatprep.subr.mxu0 0.0
  %351 = vmatpush1.msra.mxu0 0.0
  %352 = vmatprep.subr.mxu0 0.0
  %353 = vmatpush1.msra.mxu0 0.0
  %354 = vmatprep.subr.mxu0 0.0
  %355 = vmatpush1.msra.mxu0 0.0
  %356 = vmatprep.subr.mxu0 0.0
  %357 = vmatpush1.msra.mxu0 0.0
  %358 = vmatprep.subr.mxu0 0.0
  %359 = vmatpush1.msra.mxu0 0.0
  %360 = vmatprep.subr.mxu0 0.0
  %361 = vmatpush1.msra.mxu0 0.0
  %362 = vmatprep.subr.mxu0 0.0
  %363 = vmatpush1.msra.mxu0 0.0
  %364 = vmatprep.subr.mxu0 0.0
  %365 = vmatpush1.msra.mxu0 0.0
  %366 = vmatprep.subr.mxu0 0.0
  %367 = vmatpush1.msra.mxu0 0.0
  %368 = vmatprep.subr.mxu0 0.0
  %369 = vmatpush1.msra.mxu0 0.0
  %370 = vmatprep.subr.mxu0 0.0
  %371 = vmatpush1.msra.mxu0 0.0
  %372 = vmatprep.mubr.f32.mxu0 0.0
  %373 = vmatmul.mubr.f32.gmra.mrb[0].mxu0 %v177
  %v374 = vpop.f32.mrb[0].mxu0
  %v375 = vadd.f32 %v169, %v374
  %v376 = vpop.f32.mrb[0].mxu0
  %v377 = vadd.f32 %v169, %v376
  %378 = vmatprep.mubr.f32.mxu0 0.0
  %379 = vmatmul.mubr.f32.gmra.mrb[0].mxu0 %v179
  %v380 = vpop.f32.mrb[0].mxu0
  %v381 = vadd.f32 %v174, %v380
  %v382 = vpop.f32.mrb[0].mxu0
  %v383 = vadd.f32 %v174, %v382
  %384 = vdwg.mxu0
  %s385 = scalar_lea.vmem %s3, 32
  %386 = vst [vmem:[%s385] sm:$0xff] %v375
  %387 = vst [vmem:[%s385 + $0x8] sm:$0xff] %v377
  %388 = vst [vmem:[%s385 + $0x10] sm:$0xff] %v381
  %389 = vst [vmem:[%s385 + $0x18] sm:$0xff] %v383
  // Predicated region
  $region14: #{spc_forward.1} parent=0 // pred_check
    _
  $region15: #{spc_forward.1} parent=0 // pred_check_branch
    %391 = sbr.rel (0) target = $region17
  $region16: #{spc_forward.1} parent=0 // pred_region
    _
  $region17: #{spc_forward.1} parent=0 // pred_fallthru
    _
  // Predicated region
  $region18: #{spc_forward.1} parent=0 // pred_check
    _
  $region19: #{spc_forward.1} parent=0 // pred_check_branch
    %393 = sbr.rel (0) target = $region21
  $region20: #{spc_forward.1} parent=0 // pred_region
    _
  $region21: #{spc_forward.1} parent=0 // pred_fallthru
    _

</llo_original>
